<compile_context>
chip_gen: v7x
topology: tpu7x:2x2x1
jax: 0.10.0
libtpu: 0.0.40
codegen_flags: <defaults>
</compile_context>

<pallas_src>
import numpy as np
import jax
import jax.numpy as jnp
from jax.experimental import pallas as pl
from jax.experimental.pallas import tpu as pltpu  # noqa: F401  (TPU backend)

# ----------------------------- hyperparameters -----------------------------
B = 2            # batch
L = 8            # sequence length
E = 32           # embed_dim
VOCAB = 50       # vocab_size
HIDDEN = 32      # hidden_dim
EVENT_NUM = 5    # event_num
FILTER_NUM = 20  # fixed in module
WINDOW_SIZES = (1, 2, 3, 4)
NUM_FTRS = 1000  # vgg19.classifier[6].out_features

MAXW = len(WINDOW_SIZES)            # 4
BL = B * L                          # 16
XCOL = MAXW * E                     # 128 : im2col width
NUM_REAL_CONV = MAXW * FILTER_NUM   # 80  : real conv output columns
CONV_COLS = 128                     # conv output columns (80 real + 48 zero)
VGG_PAD = 1024                      # NUM_FTRS padded to a lane multiple
ZDIM = CONV_COLS + VGG_PAD          # 1152 : fused fc input width
H2 = 2 * HIDDEN                     # 64
OUT_PAD = 128                       # lane-dense packed output width

NEG_SLOPE = 0.01                    # functional.leaky_relu default
NEG_BIG = -1e30                     # additive "minus infinity" for masking


def _lrelu(x, slope=NEG_SLOPE):
    return jnp.where(x > 0, x, slope * x)


def _softmax_rows(z):
    z = z - jnp.max(z, axis=1, keepdims=True)
    e = jnp.exp(z)
    return e / jnp.sum(e, axis=1, keepdims=True)


# --------------------------------- kernel ----------------------------------
def eann_kernel(xm_ref, tmask_ref, vgg_ref,
                wconv_ref, wfused_ref, whead_ref, bias_ref,
                out_ref):
    bias = bias_ref[...]                                   # (8, 128)

    # --- text: mask the token embeddings (packed: rows 0..15 emb, 16..31 mask)
    xm = xm_ref[...]                                       # (2*BL, E)
    x = xm[0:BL, :] * xm[BL:2 * BL, :]                     # (BL, E)

    # --- im2col: row r gets [x[r], x[r+1], x[r+2], x[r+3]] (zero padded);
    #     rows that would cross a window/batch boundary are invalidated by the
    #     additive time mask below. ---
    xp = jnp.concatenate(
        [x, jnp.zeros((MAXW - 1, E), jnp.float32)], axis=0)   # (BL+3, E)
    xcol = jnp.concatenate([xp[k:k + BL, :] for k in range(MAXW)],
                           axis=1)                          # (BL, 128)

    # --- all four text convs as ONE matmul + bias + leaky_relu ---
    s = jnp.dot(xcol, wconv_ref[...], preferred_element_type=jnp.float32)
    s = _lrelu(s + bias[0:1, :])                            # (BL, 128)

    # --- mask out-of-window time steps, max-pool over time per sample ---
    s = s + tmask_ref[...]                                  # additive -1e30
    pooled = jnp.concatenate(
        [jnp.max(s[b * L:(b + 1) * L, :], axis=0, keepdims=True)
         for b in range(B)], axis=0)                        # (B, 128); cols>=80 are 0

    # --- fused fc1 / image_fc1 (block-diagonal weight) ---
    z = jnp.concatenate([pooled, vgg_ref[...]], axis=1)     # (B, 1152)
    ti = _lrelu(jnp.dot(z, wfused_ref[...],
                        preferred_element_type=jnp.float32)
                + bias[1:2, 0:H2])                          # (B, 64) = [text_h | img_h]

    # --- fused class head + domain fc1 in one matmul ---
    whead = whead_ref[...]                                  # (96, 128)
    hout = jnp.dot(ti, whead[0:H2, :],
                   preferred_element_type=jnp.float32) + bias[2:3, :]  # (B, 128)

    # class classifier: Linear(2H, 2) + Softmax
    class_probs = _softmax_rows(hout[:, 0:2])               # (B, 2)

    # domain classifier (grad_reverse is identity in forward).
    # nn.LeakyReLU(True) => negative_slope = 1.0 => identity (kept for fidelity)
    d1 = _lrelu(hout[:, HIDDEN:H2], slope=1.0)              # (B, 32)
    d2 = jnp.dot(d1, whead[H2:H2 + HIDDEN, :],
                 preferred_element_type=jnp.float32)        # (B, 128)
    domain_probs = _softmax_rows(d2[:, 0:EVENT_NUM]
                                 + bias[3:4, 0:EVENT_NUM])  # (B, 5)

    # --- single lane-dense packed output ---
    out_ref[...] = jnp.concatenate(
        [class_probs, domain_probs,
         jnp.zeros((B, OUT_PAD - 2 - EVENT_NUM), jnp.float32)], axis=1)


# ---------------------------- weight packing --------------------------------
def _pack_params(params):
    F = FILTER_NUM

    # Stacked im2col conv weight (128, 128): rows k*E+e, cols k_idx*F+f.
    wconv = jnp.zeros((XCOL, CONV_COLS), jnp.float32)
    for k_idx, K in enumerate(WINDOW_SIZES):
        w = params[f"conv{K}_w"]                            # (F, K, E)
        for k in range(K):
            wconv = wconv.at[k * E:(k + 1) * E,
                             k_idx * F:(k_idx + 1) * F].set(w[:, k, :].T)

    # Block-diagonal fused fc weight: [text(128) | vgg(1024)] -> [text_h | img_h].
    wfused = jnp.zeros((ZDIM, H2), jnp.float32)
    wfused = wfused.at[0:NUM_REAL_CONV, 0:HIDDEN].set(params["fc1_w"].T)
    wfused = wfused.at[CONV_COLS:CONV_COLS + NUM_FTRS,
                       HIDDEN:H2].set(params["image_fc1_w"].T)

    # Packed head weights (96, 128):
    #   rows 0..63 : class head -> cols 0..1, domain fc1 -> cols 32..63
    #   rows 64..95: domain fc2 -> cols 0..4
    whead = jnp.zeros((H2 + HIDDEN, 128), jnp.float32)
    whead = whead.at[0:H2, 0:2].set(params["class_w"].T)
    whead = whead.at[0:H2, HIDDEN:H2].set(params["dom1_w"].T)
    whead = whead.at[H2:H2 + HIDDEN, 0:EVENT_NUM].set(params["dom2_w"].T)

    # Packed biases (8, 128): row0 conv, row1 fused fc, row2 heads, row3 dom fc2.
    biasp = jnp.zeros((8, 128), jnp.float32)
    biasp = biasp.at[0, 0:NUM_REAL_CONV].set(params["conv_b"].reshape(-1))
    biasp = biasp.at[1, 0:HIDDEN].set(params["fc1_b"])
    biasp = biasp.at[1, HIDDEN:H2].set(params["image_fc1_b"])
    biasp = biasp.at[2, 0:2].set(params["class_b"])
    biasp = biasp.at[2, HIDDEN:H2].set(params["dom1_b"])
    biasp = biasp.at[3, 0:EVENT_NUM].set(params["dom2_b"])

    return wconv, wfused, whead, biasp


def _time_mask():
    # Additive mask (BL, 128): -1e30 where time step t is invalid for the
    # window that owns the column (col // FILTER_NUM, clamped to 3).
    m = np.zeros((BL, CONV_COLS), np.float32)
    for c in range(CONV_COLS):
        K = min(c // FILTER_NUM, MAXW - 1) + 1
        for r in range(BL):
            t = r % L
            if t > L - K:
                m[r, c] = NEG_BIG
    return jnp.asarray(m)


# -------------------------------- wrapper -----------------------------------
def eann_forward(text_ids, mask, vgg_feat, params):
    # Glue (gather / pad / weight packing); all conv/fc/softmax math is in-kernel.
    emb = params["embed"][text_ids].astype(jnp.float32).reshape(BL, E)
    mask2d = jnp.broadcast_to(mask.astype(jnp.float32).reshape(BL, 1), (BL, E))
    xm = jnp.concatenate([emb, mask2d], axis=0)             # (2*BL, E), one DMA
    vggp = jnp.zeros((B, VGG_PAD), jnp.float32).at[:, 0:NUM_FTRS].set(
        vgg_feat.astype(jnp.float32))

    wconv, wfused, whead, biasp = _pack_params(params)
    tmask = _time_mask()

    # Single invocation (no grid): every buffer fits comfortably in VMEM
    # (~0.8 MB total), so all inputs/outputs are whole-array VMEM blocks.
    out = pl.pallas_call(
        eann_kernel,
        out_shape=jax.ShapeDtypeStruct((B, OUT_PAD), jnp.float32),
    )(xm, tmask, vggp, wconv, wfused, whead, biasp)

    class_out = out[:, 0:2]
    domain_out = out[:, 2:2 + EVENT_NUM]
    return class_out, domain_out


# ------------------------------ param init ----------------------------------
def init_params(key):
    ks = jax.random.split(key, 16)
    p = {}
    p["embed"] = 0.1 * jax.random.normal(ks[0], (VOCAB, E), jnp.float32)
    for i, K in enumerate(WINDOW_SIZES):
        p[f"conv{K}_w"] = 0.1 * jax.random.normal(
            ks[1 + i], (FILTER_NUM, K, E), jnp.float32)  # Conv2d(1,20,(K,E)), in-ch squeezed
    p["conv_b"] = 0.05 * jax.random.normal(ks[5], (4, FILTER_NUM), jnp.float32)
    p["fc1_w"] = 0.1 * jax.random.normal(
        ks[6], (HIDDEN, len(WINDOW_SIZES) * FILTER_NUM), jnp.float32)
    p["fc1_b"] = 0.05 * jax.random.normal(ks[7], (HIDDEN,), jnp.float32)
    p["image_fc1_w"] = 0.05 * jax.random.normal(ks[8], (HIDDEN, NUM_FTRS), jnp.float32)
    p["image_fc1_b"] = 0.05 * jax.random.normal(ks[9], (HIDDEN,), jnp.float32)
    p["class_w"] = 0.1 * jax.random.normal(ks[10], (2, 2 * HIDDEN), jnp.float32)
    p["class_b"] = 0.05 * jax.random.normal(ks[11], (2,), jnp.float32)
    p["dom1_w"] = 0.1 * jax.random.normal(ks[12], (HIDDEN, 2 * HIDDEN), jnp.float32)
    p["dom1_b"] = 0.05 * jax.random.normal(ks[13], (HIDDEN,), jnp.float32)
    p["dom2_w"] = 0.1 * jax.random.normal(ks[14], (EVENT_NUM, HIDDEN), jnp.float32)
    p["dom2_b"] = 0.05 * jax.random.normal(ks[15], (EVENT_NUM,), jnp.float32)
    return p


# ----------------------------- reference (JAX) -------------------------------
def eann_reference(text_ids, mask, vgg_feat, p):
    emb = p["embed"][text_ids]
    x = emb * mask[:, :, None]
    feats = []
    for i, K in enumerate(WINDOW_SIZES):
        W = p[f"conv{K}_w"]                              # (20, K, E)
        T = L - K + 1
        s = jnp.zeros((B, T, FILTER_NUM), jnp.float32)
        for k in range(K):
            s = s + jnp.einsum("ble,fe->blf", x[:, k:k + T, :], W[:, k, :])
        s = _lrelu(s + p["conv_b"][i][None, None, :])
        feats.append(jnp.max(s, axis=1))
    t = jnp.concatenate(feats, axis=1)
    t = _lrelu(t @ p["fc1_w"].T + p["fc1_b"])
    im = _lrelu(vgg_feat @ p["image_fc1_w"].T + p["image_fc1_b"])
    ti = jnp.concatenate([t, im], axis=1)
    c = _softmax_rows(ti @ p["class_w"].T + p["class_b"])
    d = _lrelu(ti @ p["dom1_w"].T + p["dom1_b"], slope=1.0)
    d = _softmax_rows(d @ p["dom2_w"].T + p["dom2_b"])
    return c, d


# --------------------------------- main --------------------------------------
if __name__ == "__main__":
    key = jax.random.PRNGKey(0)
    k_param, k_text, k_mask, k_img = jax.random.split(key, 4)

    params = init_params(k_param)
    text_ids = jax.random.randint(k_text, (B, L), 0, VOCAB)
    mask = (jax.random.uniform(k_mask, (B, L)) > 0.2).astype(jnp.float32)
    # Precomputed VGG19 classifier output features (backbone is TODO, see header).
    vgg_feat = jax.random.normal(k_img, (B, NUM_FTRS), jnp.float32)

    class_out, domain_out = eann_forward(text_ids, mask, vgg_feat, params)
    jax.block_until_ready((class_out, domain_out))

    ref_c, ref_d = eann_reference(text_ids, mask, vgg_feat, params)
    assert class_out.shape == (B, 2) and domain_out.shape == (B, EVENT_NUM)
    assert jnp.allclose(class_out, ref_c, atol=1e-5, rtol=1e-5)
    assert jnp.allclose(domain_out, ref_d, atol=1e-5, rtol=1e-5)
    assert jnp.allclose(jnp.sum(class_out, axis=1), 1.0, atol=1e-5)
    assert jnp.allclose(jnp.sum(domain_out, axis=1), 1.0, atol=1e-5)

    print("KERNEL_OK")
</pallas_src>

<mosaic_0001>
module attributes {stable_mosaic.version = 11 : i64} {
  func.func @eann_kernel(%arg0: memref<32x32xf32, #tpu.memory_space<vmem>>, %arg1: memref<16x128xf32, #tpu.memory_space<vmem>>, %arg2: memref<2x1024xf32, #tpu.memory_space<vmem>>, %arg3: memref<128x128xf32, #tpu.memory_space<vmem>>, %arg4: memref<1152x64xf32, #tpu.memory_space<vmem>>, %arg5: memref<96x128xf32, #tpu.memory_space<vmem>>, %arg6: memref<8x128xf32, #tpu.memory_space<vmem>>, %arg7: memref<2x128xf32, #tpu.memory_space<vmem>>) attributes {dimension_semantics = [], scalar_prefetch = 0 : i64, scratch_operands = 0 : i64, tpu.core_type = #tpu.core_type<tc>} {
    %c0 = arith.constant 0 : index
    %c0_0 = arith.constant 0 : index
    %0 = vector.load %arg6[%c0, %c0_0] : memref<8x128xf32, #tpu.memory_space<vmem>>, vector<8x128xf32>
    %c0_1 = arith.constant 0 : index
    %c0_2 = arith.constant 0 : index
    %1 = vector.load %arg0[%c0_1, %c0_2] : memref<32x32xf32, #tpu.memory_space<vmem>>, vector<32x32xf32>
    %2 = vector.extract_strided_slice %1 {offsets = [0, 0], sizes = [16, 32], strides = [1, 1]} : vector<32x32xf32> to vector<16x32xf32>
    %3 = vector.extract_strided_slice %1 {offsets = [16, 0], sizes = [16, 32], strides = [1, 1]} : vector<32x32xf32> to vector<16x32xf32>
    %4 = arith.mulf %2, %3 : vector<16x32xf32>
    %cst = arith.constant 0.000000e+00 : f32
    %5 = vector.broadcast %cst : f32 to vector<3x32xf32>
    %6 = tpu.concatenate %4, %5 in 0 : vector<16x32xf32>, vector<3x32xf32> -> vector<19x32xf32>
    %7 = vector.extract_strided_slice %6 {offsets = [0, 0], sizes = [16, 32], strides = [1, 1]} : vector<19x32xf32> to vector<16x32xf32>
    %8 = vector.extract_strided_slice %6 {offsets = [1, 0], sizes = [16, 32], strides = [1, 1]} : vector<19x32xf32> to vector<16x32xf32>
    %9 = vector.extract_strided_slice %6 {offsets = [2, 0], sizes = [16, 32], strides = [1, 1]} : vector<19x32xf32> to vector<16x32xf32>
    %10 = vector.extract_strided_slice %6 {offsets = [3, 0], sizes = [16, 32], strides = [1, 1]} : vector<19x32xf32> to vector<16x32xf32>
    %11 = tpu.concatenate %7, %8, %9, %10 in 1 : vector<16x32xf32>, vector<16x32xf32>, vector<16x32xf32>, vector<16x32xf32> -> vector<16x128xf32>
    %c0_3 = arith.constant 0 : index
    %c0_4 = arith.constant 0 : index
    %12 = vector.load %arg3[%c0_3, %c0_4] : memref<128x128xf32, #tpu.memory_space<vmem>>, vector<128x128xf32>
    %cst_5 = arith.constant dense<0.000000e+00> : vector<16x128xf32>
    %13 = tpu.matmul %11, %12, %cst_5 {dimension_numbers = #tpu.dot_dimension_numbers<[1], [0], [0], [1], [0, 0, 1, 1], [], []>} : vector<16x128xf32>, vector<128x128xf32>, vector<16x128xf32> -> vector<16x128xf32>
    %14 = vector.extract_strided_slice %0 {offsets = [0, 0], sizes = [1, 128], strides = [1, 1]} : vector<8x128xf32> to vector<1x128xf32>
    %15 = vector.broadcast %14 : vector<1x128xf32> to vector<16x128xf32>
    %16 = arith.addf %13, %15 : vector<16x128xf32>
    %cst_6 = arith.constant 0.000000e+00 : f32
    %17 = vector.broadcast %cst_6 : f32 to vector<16x128xf32>
    %18 = arith.cmpf ogt, %16, %17 : vector<16x128xf32>
    %cst_7 = arith.constant 0.00999999977 : f32
    %19 = vector.broadcast %cst_7 : f32 to vector<16x128xf32>
    %20 = arith.mulf %19, %16 : vector<16x128xf32>
    %21 = arith.select %18, %16, %20 : vector<16x128xi1>, vector<16x128xf32>
    %c0_8 = arith.constant 0 : index
    %c0_9 = arith.constant 0 : index
    %22 = vector.load %arg1[%c0_8, %c0_9] : memref<16x128xf32, #tpu.memory_space<vmem>>, vector<16x128xf32>
    %23 = arith.addf %21, %22 : vector<16x128xf32>
    %24 = vector.extract_strided_slice %23 {offsets = [0, 0], sizes = [8, 128], strides = [1, 1]} : vector<16x128xf32> to vector<8x128xf32>
    %cst_10 = arith.constant dense<0xFF800000> : vector<128xf32>
    %25 = vector.multi_reduction <maximumf>, %24, %cst_10 [0] : vector<8x128xf32> to vector<128xf32>
    %26 = vector.shape_cast %25 : vector<128xf32> to vector<1x128xf32>
    %27 = vector.extract_strided_slice %23 {offsets = [8, 0], sizes = [8, 128], strides = [1, 1]} : vector<16x128xf32> to vector<8x128xf32>
    %cst_11 = arith.constant dense<0xFF800000> : vector<128xf32>
    %28 = vector.multi_reduction <maximumf>, %27, %cst_11 [0] : vector<8x128xf32> to vector<128xf32>
    %29 = vector.shape_cast %28 : vector<128xf32> to vector<1x128xf32>
    %30 = tpu.concatenate %26, %29 in 0 : vector<1x128xf32>, vector<1x128xf32> -> vector<2x128xf32>
    %c0_12 = arith.constant 0 : index
    %c0_13 = arith.constant 0 : index
    %31 = vector.load %arg2[%c0_12, %c0_13] : memref<2x1024xf32, #tpu.memory_space<vmem>>, vector<2x1024xf32>
    %32 = tpu.concatenate %30, %31 in 1 : vector<2x128xf32>, vector<2x1024xf32> -> vector<2x1152xf32>
    %c0_14 = arith.constant 0 : index
    %c0_15 = arith.constant 0 : index
    %33 = vector.load %arg4[%c0_14, %c0_15] : memref<1152x64xf32, #tpu.memory_space<vmem>>, vector<1152x64xf32>
    %cst_16 = arith.constant dense<0.000000e+00> : vector<2x64xf32>
    %34 = tpu.matmul %32, %33, %cst_16 {dimension_numbers = #tpu.dot_dimension_numbers<[1], [0], [0], [1], [0, 0, 1, 1], [], []>} : vector<2x1152xf32>, vector<1152x64xf32>, vector<2x64xf32> -> vector<2x64xf32>
    %35 = vector.extract_strided_slice %0 {offsets = [1, 0], sizes = [1, 64], strides = [1, 1]} : vector<8x128xf32> to vector<1x64xf32>
    %36 = vector.broadcast %35 : vector<1x64xf32> to vector<2x64xf32>
    %37 = arith.addf %34, %36 : vector<2x64xf32>
    %cst_17 = arith.constant 0.000000e+00 : f32
    %38 = vector.broadcast %cst_17 : f32 to vector<2x64xf32>
    %39 = arith.cmpf ogt, %37, %38 : vector<2x64xf32>
    %cst_18 = arith.constant 0.00999999977 : f32
    %40 = vector.broadcast %cst_18 : f32 to vector<2x64xf32>
    %41 = arith.mulf %40, %37 : vector<2x64xf32>
    %42 = arith.select %39, %37, %41 : vector<2x64xi1>, vector<2x64xf32>
    %c0_19 = arith.constant 0 : index
    %c0_20 = arith.constant 0 : index
    %43 = vector.load %arg5[%c0_19, %c0_20] : memref<96x128xf32, #tpu.memory_space<vmem>>, vector<96x128xf32>
    %44 = vector.extract_strided_slice %43 {offsets = [0, 0], sizes = [64, 128], strides = [1, 1]} : vector<96x128xf32> to vector<64x128xf32>
    %cst_21 = arith.constant dense<0.000000e+00> : vector<2x128xf32>
    %45 = tpu.matmul %42, %44, %cst_21 {dimension_numbers = #tpu.dot_dimension_numbers<[1], [0], [0], [1], [0, 0, 1, 1], [], []>} : vector<2x64xf32>, vector<64x128xf32>, vector<2x128xf32> -> vector<2x128xf32>
    %46 = vector.extract_strided_slice %0 {offsets = [2, 0], sizes = [1, 128], strides = [1, 1]} : vector<8x128xf32> to vector<1x128xf32>
    %47 = vector.broadcast %46 : vector<1x128xf32> to vector<2x128xf32>
    %48 = arith.addf %45, %47 : vector<2x128xf32>
    %49 = vector.extract_strided_slice %48 {offsets = [0, 0], sizes = [2, 2], strides = [1, 1]} : vector<2x128xf32> to vector<2x2xf32>
    %cst_22 = arith.constant dense<0xFF800000> : vector<2xf32>
    %50 = vector.multi_reduction <maximumf>, %49, %cst_22 [1] : vector<2x2xf32> to vector<2xf32>
    %51 = vector.shape_cast %50 : vector<2xf32> to vector<2x1xf32>
    %52 = vector.broadcast %51 : vector<2x1xf32> to vector<2x2xf32>
    %53 = arith.subf %49, %52 : vector<2x2xf32>
    %54 = math.exp %53 : vector<2x2xf32>
    %cst_23 = arith.constant dense<0.000000e+00> : vector<2xf32>
    %55 = vector.multi_reduction <add>, %54, %cst_23 [1] : vector<2x2xf32> to vector<2xf32>
    %56 = vector.shape_cast %55 : vector<2xf32> to vector<2x1xf32>
    %57 = vector.broadcast %56 : vector<2x1xf32> to vector<2x2xf32>
    %58 = arith.divf %54, %57 : vector<2x2xf32>
    %59 = vector.extract_strided_slice %48 {offsets = [0, 32], sizes = [2, 32], strides = [1, 1]} : vector<2x128xf32> to vector<2x32xf32>
    %cst_24 = arith.constant 0.000000e+00 : f32
    %60 = vector.broadcast %cst_24 : f32 to vector<2x32xf32>
    %61 = arith.cmpf ogt, %59, %60 : vector<2x32xf32>
    %cst_25 = arith.constant 1.000000e+00 : f32
    %62 = vector.broadcast %cst_25 : f32 to vector<2x32xf32>
    %63 = arith.mulf %62, %59 : vector<2x32xf32>
    %64 = arith.select %61, %59, %63 : vector<2x32xi1>, vector<2x32xf32>
    %65 = vector.extract_strided_slice %43 {offsets = [64, 0], sizes = [32, 128], strides = [1, 1]} : vector<96x128xf32> to vector<32x128xf32>
    %cst_26 = arith.constant dense<0.000000e+00> : vector<2x128xf32>
    %66 = tpu.matmul %64, %65, %cst_26 {dimension_numbers = #tpu.dot_dimension_numbers<[1], [0], [0], [1], [0, 0, 1, 1], [], []>} : vector<2x32xf32>, vector<32x128xf32>, vector<2x128xf32> -> vector<2x128xf32>
    %67 = vector.extract_strided_slice %66 {offsets = [0, 0], sizes = [2, 5], strides = [1, 1]} : vector<2x128xf32> to vector<2x5xf32>
    %68 = vector.extract_strided_slice %0 {offsets = [3, 0], sizes = [1, 5], strides = [1, 1]} : vector<8x128xf32> to vector<1x5xf32>
    %69 = vector.broadcast %68 : vector<1x5xf32> to vector<2x5xf32>
    %70 = arith.addf %67, %69 : vector<2x5xf32>
    %cst_27 = arith.constant dense<0xFF800000> : vector<2xf32>
    %71 = vector.multi_reduction <maximumf>, %70, %cst_27 [1] : vector<2x5xf32> to vector<2xf32>
    %72 = vector.shape_cast %71 : vector<2xf32> to vector<2x1xf32>
    %73 = vector.broadcast %72 : vector<2x1xf32> to vector<2x5xf32>
    %74 = arith.subf %70, %73 : vector<2x5xf32>
    %75 = math.exp %74 : vector<2x5xf32>
    %cst_28 = arith.constant dense<0.000000e+00> : vector<2xf32>
    %76 = vector.multi_reduction <add>, %75, %cst_28 [1] : vector<2x5xf32> to vector<2xf32>
    %77 = vector.shape_cast %76 : vector<2xf32> to vector<2x1xf32>
    %78 = vector.broadcast %77 : vector<2x1xf32> to vector<2x5xf32>
    %79 = arith.divf %75, %78 : vector<2x5xf32>
    %cst_29 = arith.constant 0.000000e+00 : f32
    %80 = vector.broadcast %cst_29 : f32 to vector<2x121xf32>
    %81 = tpu.concatenate %58, %79, %80 in 1 : vector<2x2xf32>, vector<2x5xf32>, vector<2x121xf32> -> vector<2x128xf32>
    %c0_30 = arith.constant 0 : index
    %c0_31 = arith.constant 0 : index
    %82 = vector.load %arg7[%c0_30, %c0_31] : memref<2x128xf32, #tpu.memory_space<vmem>>, vector<2x128xf32>
    tpu.vector_store %arg7[%c0_30, %c0_31], %81 {strides = array<i32>} : memref<2x128xf32, #tpu.memory_space<vmem>>, vector<2x128xf32>,
    return
  }
}

</mosaic_0001>

<llo_original>
// kernel: tpu_custom_call.1
$region0: #{tpu_custom_call.1}
  #allocation0 [shape = 'u32[]', space=smem, size = 0x4, offset = 0x4, fixed_abs, tag = 'smem constant byte address 0x4 - core index']
  #allocation1 [shape = 'u32[144,128]{1,0:T(1,128)}', space=vmem, size = 0x12000, scoped, tag = 'internal scratch']
  %s0 = inlined_call_operand.vmem [shape: f32[32,32], index: 0, kind: input, shape index: {}]
  %s1 = inlined_call_operand.vmem [shape: f32[16,128], index: 1, kind: input, shape index: {}]
  %s2 = inlined_call_operand.vmem [shape: f32[2,1024], index: 2, kind: input, shape index: {}]
  %s3 = inlined_call_operand.vmem [shape: f32[128,128], index: 3, kind: input, shape index: {}]
  %s4 = inlined_call_operand.vmem [shape: f32[1152,64], index: 4, kind: input, shape index: {}]
  %s5 = inlined_call_operand.vmem [shape: f32[96,128], index: 5, kind: input, shape index: {}]
  %s6 = inlined_call_operand.vmem [shape: f32[8,128], index: 6, kind: input, shape index: {}]
  %s7 = inlined_call_operand.hbm [shape: f32[2,128], index: 7, kind: output, shape index: {}]
  %s8 = sld [smem:[#allocation0]]
  $region38: #{tpu_custom_call.1} parent=0
    _
  %s10 = ssub.s32 1, %s8
  %s11 = scalar_select 0, %s10, %s8
  $region1: #{tpu_custom_call.1} parent=0
    #allocation2 [shape = 'u8[1024]{0}', space=vmem, size = 0x400, scoped, tag = 'output window, operand 0, single buffered']
    #allocation3 [shape = 's32[1]{0}', space=sflag, size = 0x4, scoped, tag = 'scoped memory for tpu_custom_call.1']
    %12 = vsyncpa [#allocation3], 0
    // Predicated region
    $region2: #{tpu_custom_call.1} parent=1 // pred_check
      _
    $region3: #{tpu_custom_call.1} parent=1 // pred_check_branch
      %14 = sbr.rel (0) target = $region5
    $region4: #{tpu_custom_call.1} parent=1 // pred_region
      _
    $region5: #{tpu_custom_call.1} parent=1 // pred_fallthru
      _
    // Predicated region
    $region6: #{tpu_custom_call.1} parent=1 // pred_check
      _
    $region7: #{tpu_custom_call.1} parent=1 // pred_check_branch
      %16 = sbr.rel (0) target = $region9
    $region8: #{tpu_custom_call.1} parent=1 // pred_region
      _
    $region9: #{tpu_custom_call.1} parent=1 // pred_fallthru
      _
    // Predicated region
    $region10: #{tpu_custom_call.1} parent=1 // pred_check
      _
    $region11: #{tpu_custom_call.1} parent=1 // pred_check_branch
      %18 = sbr.rel (0) target = $region13
    $region12: #{tpu_custom_call.1} parent=1 // pred_region
      _
    $region13: #{tpu_custom_call.1} parent=1 // pred_fallthru
      _
    // Predicated region
    $region14: #{tpu_custom_call.1} parent=1 // pred_check
      _
    $region15: #{tpu_custom_call.1} parent=1 // pred_check_branch
      %20 = sbr.rel (0) target = $region17
    $region16: #{tpu_custom_call.1} parent=1 // pred_region
      _
    $region17: #{tpu_custom_call.1} parent=1 // pred_fallthru
      _
    // Predicated region
    $region18: #{tpu_custom_call.1} parent=1 // pred_check
      _
    $region19: #{tpu_custom_call.1} parent=1 // pred_check_branch
      %22 = sbr.rel (0) target = $region21
    $region20: #{tpu_custom_call.1} parent=1 // pred_region
      _
    $region21: #{tpu_custom_call.1} parent=1 // pred_fallthru
      _
    // Predicated region
    $region22: #{tpu_custom_call.1} parent=1 // pred_check
      _
    $region23: #{tpu_custom_call.1} parent=1 // pred_check_branch
      %24 = sbr.rel (0) target = $region25
    $region24: #{tpu_custom_call.1} parent=1 // pred_region
      _
    $region25: #{tpu_custom_call.1} parent=1 // pred_fallthru
      _
    // Predicated region
    $region26: #{tpu_custom_call.1} parent=1 // pred_check
      _
    $region27: #{tpu_custom_call.1} parent=1 // pred_check_branch
      %26 = sbr.rel (0) target = $region29
    $region28: #{tpu_custom_call.1} parent=1 // pred_region
      _
    $region29: #{tpu_custom_call.1} parent=1 // pred_fallthru
      _
    %v27 = vld [vmem:[%s6] sm:$0xff]
    %v28 = vld [vmem:[%s0] sm:$0xff]
    %v29 = vld [vmem:[%s0 + $0x8] sm:$0xff]
    %v30 = vld [vmem:[%s0 + $0x10] sm:$0xff]
    %v31 = vld [vmem:[%s0 + $0x18] sm:$0xff]
    %v32 = vmul.f32 %v28, %v30
    %v33 = vmul.f32 %v29, %v31
    %vm37 = vcmask 1046528
    %v38 = vrot.slane %v32, 1
    %v39 = vrot.slane %v33, 1
    %v40 = vsel %vm37, %v38, %v39
    %v41 = vrot.slane 0.0, 1
    %v42 = vsel %vm37, %v39, %v41
    %43 = vrot.lane.b32.xlu0 %v40, 32
    %v44 = vpop.permute.xlu0 %43
    %45 = vrot.lane.b32.xlu0 %v42, 32
    %v46 = vpop.permute.xlu0 %45
    %vm49 = vcmask 1045504
    %v50 = vrot.slane %v32, 2
    %v51 = vrot.slane %v33, 2
    %v52 = vsel %vm49, %v50, %v51
    %v53 = vrot.slane 0.0, 2
    %v54 = vsel %vm49, %v51, %v53
    %55 = vrot.lane.b32.xlu0 %v52, 64
    %v56 = vpop.permute.xlu0 %55
    %57 = vrot.lane.b32.xlu0 %v54, 64
    %v58 = vpop.permute.xlu0 %57
    %vm61 = vcmask 1044480
    %v62 = vrot.slane %v32, 3
    %v63 = vrot.slane %v33, 3
    %v64 = vsel %vm61, %v62, %v63
    %v65 = vrot.slane 0.0, 3
    %v66 = vsel %vm61, %v63, %v65
    %67 = vrot.lane.b32.xlu0 %v64, 96
    %v68 = vpop.permute.xlu0 %67
    %69 = vrot.lane.b32.xlu0 %v66, 96
    %v70 = vpop.permute.xlu0 %69
    %vm73 = vcmask 261120
    %v74 = vsel %vm73, %v32, %v44
    %v75 = vsel %vm73, %v33, %v46
    %vm76 = vcmask 523264
    %v77 = vsel %vm76, %v74, %v56
    %v78 = vsel %vm76, %v75, %v58
    %vm79 = vcmask 785408
    %v80 = vsel %vm79, %v77, %v68
    %v81 = vsel %vm79, %v78, %v70
    %v82 = vld [vmem:[%s3] sm:$0xff]
    %v83 = vld [vmem:[%s3 + $0x8] sm:$0xff]
    %v84 = vld [vmem:[%s3 + $0x10] sm:$0xff]
    %v85 = vld [vmem:[%s3 + $0x18] sm:$0xff]
    %v86 = vld [vmem:[%s3 + $0x20] sm:$0xff]
    %v87 = vld [vmem:[%s3 + $0x28] sm:$0xff]
    %v88 = vld [vmem:[%s3 + $0x30] sm:$0xff]
    %v89 = vld [vmem:[%s3 + $0x38] sm:$0xff]
    %v90 = vld [vmem:[%s3 + $0x40] sm:$0xff]
    %v91 = vld [vmem:[%s3 + $0x48] sm:$0xff]
    %v92 = vld [vmem:[%s3 + $0x50] sm:$0xff]
    %v93 = vld [vmem:[%s3 + $0x58] sm:$0xff]
    %v94 = vld [vmem:[%s3 + $0x60] sm:$0xff]
    %v95 = vld [vmem:[%s3 + $0x68] sm:$0xff]
    %v96 = vld [vmem:[%s3 + $0x70] sm:$0xff]
    %v97 = vld [vmem:[%s3 + $0x78] sm:$0xff]
    %v98 = vlaneseq
    %v99 = vshrl.u32 %v98, 7
    %v100 = vsub.s32 0, %v99
    %v101 = vrot.slane %v27, %v100
    %102 = vmatprep.subr.mxu0 0.0
    %103 = vmatpush1.msra.mxu0 %v82
    %104 = vmatprep.subr.mxu0 0.0
    %105 = vmatpush1.msra.mxu0 %v83
    %106 = vmatprep.subr.mxu0 0.0
    %107 = vmatpush1.msra.mxu0 %v84
    %108 = vmatprep.subr.mxu0 0.0
    %109 = vmatpush1.msra.mxu0 %v85
    %110 = vmatprep.subr.mxu0 0.0
    %111 = vmatpush1.msra.mxu0 %v86
    %112 = vmatprep.subr.mxu0 0.0
    %113 = vmatpush1.msra.mxu0 %v87
    %114 = vmatprep.subr.mxu0 0.0
    %115 = vmatpush1.msra.mxu0 %v88
    %116 = vmatprep.subr.mxu0 0.0
    %117 = vmatpush1.msra.mxu0 %v89
    %118 = vmatprep.subr.mxu0 0.0
    %119 = vmatpush1.msra.mxu0 %v90
    %120 = vmatprep.subr.mxu0 0.0
    %121 = vmatpush1.msra.mxu0 %v91
    %122 = vmatprep.subr.mxu0 0.0
    %123 = vmatpush1.msra.mxu0 %v92
    %124 = vmatprep.subr.mxu0 0.0
    %125 = vmatpush1.msra.mxu0 %v93
    %126 = vmatprep.subr.mxu0 0.0
    %127 = vmatpush1.msra.mxu0 %v94
    %128 = vmatprep.subr.mxu0 0.0
    %129 = vmatpush1.msra.mxu0 %v95
    %130 = vmatprep.subr.mxu0 0.0
    %131 = vmatpush1.msra.mxu0 %v96
    %132 = vmatprep.subr.mxu0 0.0
    %133 = vmatpush1.msra.mxu0 %v97
    %134 = vmatprep.subr.mxu0 0.0
    %135 = vmatpush1.msra.mxu0 0.0
    %136 = vmatprep.subr.mxu0 0.0
    %137 = vmatpush1.msra.mxu0 0.0
    %138 = vmatprep.subr.mxu0 0.0
    %139 = vmatpush1.msra.mxu0 0.0
    %140 = vmatprep.subr.mxu0 0.0
    %141 = vmatpush1.msra.mxu0 0.0
    %142 = vmatprep.subr.mxu0 0.0
    %143 = vmatpush1.msra.mxu0 0.0
    %144 = vmatprep.subr.mxu0 0.0
    %145 = vmatpush1.msra.mxu0 0.0
    %146 = vmatprep.subr.mxu0 0.0
    %147 = vmatpush1.msra.mxu0 0.0
    %148 = vmatprep.subr.mxu0 0.0
    %149 = vmatpush1.msra.mxu0 0.0
    %150 = vmatprep.subr.mxu0 0.0
    %151 = vmatpush1.msra.mxu0 0.0
    %152 = vmatprep.subr.mxu0 0.0
    %153 = vmatpush1.msra.mxu0 0.0
    %154 = vmatprep.subr.mxu0 0.0
    %155 = vmatpush1.msra.mxu0 0.0
    %156 = vmatprep.subr.mxu0 0.0
    %157 = vmatpush1.msra.mxu0 0.0
    %158 = vmatprep.subr.mxu0 0.0
    %159 = vmatpush1.msra.mxu0 0.0
    %160 = vmatprep.subr.mxu0 0.0
    %161 = vmatpush1.msra.mxu0 0.0
    %162 = vmatprep.subr.mxu0 0.0
    %163 = vmatpush1.msra.mxu0 0.0
    %164 = vmatprep.subr.mxu0 0.0
    %165 = vmatpush1.msra.mxu0 0.0
    %166 = vmatprep.mubr.f32.mxu0 0.0
    %167 = vmatmul.mubr.f32.gmra.mrb[0].mxu0 %v80
    %v168 = vpop.f32.mrb[0].mxu0
    %v169 = vadd.f32 %v101, %v168
    %v170 = vpop.f32.mrb[0].mxu0
    %171 = vmatprep.mubr.f32.mxu0 0.0
    %172 = vmatmul.mubr.f32.gmra.mrb[0].mxu0 %v81
    %v173 = vpop.f32.mrb[0].mxu0
    %v174 = vadd.f32 %v101, %v173
    %v175 = vpop.f32.mrb[0].mxu0
    %176 = vdwg.mxu0
    %vm177 = vcmp.gt.f32.partialorder %v169, 0.0
    %vm178 = vcmp.gt.f32.partialorder %v174, 0.0
    %v179 = vmul.f32 %v169, 0.01
    %v180 = vmul.f32 %v174, 0.01
    %v181 = vsel %vm177, %v169, %v179
    %v182 = vsel %vm178, %v174, %v180
    %v183 = vld [vmem:[%s1] sm:$0xff]
    %v184 = vld [vmem:[%s1 + $0x8] sm:$0xff]
    %v185 = vadd.f32 %v181, %v183
    %v186 = vadd.f32 %v182, %v184
    %v187 = vrot.slane %v185, 4
    %v188 = vmax.f32 %v185, %v187
    %v189 = vrot.slane %v188, 2
    %v190 = vmax.f32 %v188, %v189
    %v191 = vrot.slane %v190, 1
    %v192 = vmax.f32 %v190, %v191
    %v193 = vrot.slane %v186, 4
    %v194 = vmax.f32 %v186, %v193
    %v195 = vrot.slane %v194, 2
    %v196 = vmax.f32 %v194, %v195
    %v197 = vrot.slane %v196, 1
    %v198 = vmax.f32 %v196, %v197
    %vm199 = vcmask 1040384
    %v200 = vsel %vm199, %v192, %v198
    %v201 = vld [vmem:[%s2] sm:$0xff]
    %v202 = vld [vmem:[%s2 + $0x8] sm:$0xff]
    %v205 = vcombine.high %v201, %v201
    %v207 = vunpack.c.l.s4 1983009808
    %v208 = vunpack.c.0.s8 %v207
    %v209 = vlaneseq
    %v210 = vshrl.u32 %v209, 7
    %v211 = vsub.s32 %v208, %v210
    %v212 = vrot.slane %v201, %v211
    %v214 = vunpack.c.l.s4 1983009808
    %v215 = vunpack.c.0.s8 %v214
    %v216 = vlaneseq
    %v217 = vshrl.u32 %v216, 7
    %v218 = vsub.s32 %v215, %v217
    %v219 = vrot.slane %v205, %v218
    %v220 = vcombine.high %v212, %v212
    %v221 = vcombine.high %v219, %v219
    %v222 = vcombine.high %v202, %v202
    %v224 = vunpack.c.l.s4 1983009808
    %v225 = vunpack.c.0.s8 %v224
    %v226 = vlaneseq
    %v227 = vshrl.u32 %v226, 7
    %v228 = vsub.s32 %v225, %v227
    %v229 = vrot.slane %v202, %v228
    %v231 = vunpack.c.l.s4 1983009808
    %v232 = vunpack.c.0.s8 %v231
    %v233 = vlaneseq
    %v234 = vshrl.u32 %v233, 7
    %v235 = vsub.s32 %v232, %v234
    %v236 = vrot.slane %v222, %v235
    %v237 = vcombine.high %v229, %v229
    %v238 = vcombine.high %v236, %v236
    %v247 = vld [vmem:[%s4] sm:$0xff]
    %v248 = vld [vmem:[%s4 + $0x8] sm:$0xff]
    %v249 = vld [vmem:[%s4 + $0x10] sm:$0xff]
    %v250 = vld [vmem:[%s4 + $0x18] sm:$0xff]
    %v251 = vld [vmem:[%s4 + $0x20] sm:$0xff]
    %v252 = vld [vmem:[%s4 + $0x28] sm:$0xff]
    %v253 = vld [vmem:[%s4 + $0x30] sm:$0xff]
    %v254 = vld [vmem:[%s4 + $0x38] sm:$0xff]
    %v255 = vld [vmem:[%s4 + $0x40] sm:$0xff]
    %v256 = vld [vmem:[%s4 + $0x48] sm:$0xff]
    %v257 = vld [vmem:[%s4 + $0x50] sm:$0xff]
    %v258 = vld [vmem:[%s4 + $0x58] sm:$0xff]
    %v259 = vld [vmem:[%s4 + $0x60] sm:$0xff]
    %v260 = vld [vmem:[%s4 + $0x68] sm:$0xff]
    %v261 = vld [vmem:[%s4 + $0x70] sm:$0xff]
    %v262 = vld [vmem:[%s4 + $0x78] sm:$0xff]
    %v263 = vld [vmem:[%s4 + $0x80] sm:$0xff]
    %v264 = vld [vmem:[%s4 + $0x88] sm:$0xff]
    %v265 = vld [vmem:[%s4 + $0x90] sm:$0xff]
    %v266 = vld [vmem:[%s4 + $0x98] sm:$0xff]
    %v267 = vld [vmem:[%s4 + $0xa0] sm:$0xff]
    %v268 = vld [vmem:[%s4 + $0xa8] sm:$0xff]
    %v269 = vld [vmem:[%s4 + $0xb0] sm:$0xff]
    %v270 = vld [vmem:[%s4 + $0xb8] sm:$0xff]
    %v271 = vld [vmem:[%s4 + $0xc0] sm:$0xff]
    %v272 = vld [vmem:[%s4 + $0xc8] sm:$0xff]
    %v273 = vld [vmem:[%s4 + $0xd0] sm:$0xff]
    %v274 = vld [vmem:[%s4 + $0xd8] sm:$0xff]
    %v275 = vld [vmem:[%s4 + $0xe0] sm:$0xff]
    %v276 = vld [vmem:[%s4 + $0xe8] sm:$0xff]
    %v277 = vld [vmem:[%s4 + $0xf0] sm:$0xff]
    %v278 = vld [vmem:[%s4 + $0xf8] sm:$0xff]
    %v279 = vld [vmem:[%s4 + $0x100] sm:$0xff]
    %v280 = vld [vmem:[%s4 + $0x108] sm:$0xff]
    %v281 = vld [vmem:[%s4 + $0x110] sm:$0xff]
    %v282 = vld [vmem:[%s4 + $0x118] sm:$0xff]
    %v283 = vld [vmem:[%s4 + $0x120] sm:$0xff]
    %v284 = vld [vmem:[%s4 + $0x128] sm:$0xff]
    %v285 = vld [vmem:[%s4 + $0x130] sm:$0xff]
    %v286 = vld [vmem:[%s4 + $0x138] sm:$0xff]
    %v287 = vld [vmem:[%s4 + $0x140] sm:$0xff]
    %v288 = vld [vmem:[%s4 + $0x148] sm:$0xff]
    %v289 = vld [vmem:[%s4 + $0x150] sm:$0xff]
    %v290 = vld [vmem:[%s4 + $0x158] sm:$0xff]
    %v291 = vld [vmem:[%s4 + $0x160] sm:$0xff]
    %v292 = vld [vmem:[%s4 + $0x168] sm:$0xff]
    %v293 = vld [vmem:[%s4 + $0x170] sm:$0xff]
    %v294 = vld [vmem:[%s4 + $0x178] sm:$0xff]
    %v295 = vld [vmem:[%s4 + $0x180] sm:$0xff]
    %v296 = vld [vmem:[%s4 + $0x188] sm:$0xff]
    %v297 = vld [vmem:[%s4 + $0x190] sm:$0xff]
    %v298 = vld [vmem:[%s4 + $0x198] sm:$0xff]
    %v299 = vld [vmem:[%s4 + $0x1a0] sm:$0xff]
    %v300 = vld [vmem:[%s4 + $0x1a8] sm:$0xff]
    %v301 = vld [vmem:[%s4 + $0x1b0] sm:$0xff]
    %v302 = vld [vmem:[%s4 + $0x1b8] sm:$0xff]
    %v303 = vld [vmem:[%s4 + $0x1c0] sm:$0xff]
    %v304 = vld [vmem:[%s4 + $0x1c8] sm:$0xff]
    %v305 = vld [vmem:[%s4 + $0x1d0] sm:$0xff]
    %v306 = vld [vmem:[%s4 + $0x1d8] sm:$0xff]
    %v307 = vld [vmem:[%s4 + $0x1e0] sm:$0xff]
    %v308 = vld [vmem:[%s4 + $0x1e8] sm:$0xff]
    %v309 = vld [vmem:[%s4 + $0x1f0] sm:$0xff]
    %v310 = vld [vmem:[%s4 + $0x1f8] sm:$0xff]
    %v311 = vld [vmem:[%s4 + $0x200] sm:$0xff]
    %v312 = vld [vmem:[%s4 + $0x208] sm:$0xff]
    %v313 = vld [vmem:[%s4 + $0x210] sm:$0xff]
    %v314 = vld [vmem:[%s4 + $0x218] sm:$0xff]
    %v315 = vld [vmem:[%s4 + $0x220] sm:$0xff]
    %v316 = vld [vmem:[%s4 + $0x228] sm:$0xff]
    %v317 = vld [vmem:[%s4 + $0x230] sm:$0xff]
    %v318 = vld [vmem:[%s4 + $0x238] sm:$0xff]
    %v319 = vld [vmem:[%s4 + $0x240] sm:$0xff]
    %v320 = vld [vmem:[%s4 + $0x248] sm:$0xff]
    %v321 = vld [vmem:[%s4 + $0x250] sm:$0xff]
    %v322 = vld [vmem:[%s4 + $0x258] sm:$0xff]
    %v323 = vld [vmem:[%s4 + $0x260] sm:$0xff]
    %v324 = vld [vmem:[%s4 + $0x268] sm:$0xff]
    %v325 = vld [vmem:[%s4 + $0x270] sm:$0xff]
    %v326 = vld [vmem:[%s4 + $0x278] sm:$0xff]
    %v327 = vld [vmem:[%s4 + $0x280] sm:$0xff]
    %v328 = vld [vmem:[%s4 + $0x288] sm:$0xff]
    %v329 = vld [vmem:[%s4 + $0x290] sm:$0xff]
    %v330 = vld [vmem:[%s4 + $0x298] sm:$0xff]
    %v331 = vld [vmem:[%s4 + $0x2a0] sm:$0xff]
    %v332 = vld [vmem:[%s4 + $0x2a8] sm:$0xff]
    %v333 = vld [vmem:[%s4 + $0x2b0] sm:$0xff]
    %v334 = vld [vmem:[%s4 + $0x2b8] sm:$0xff]
    %v335 = vld [vmem:[%s4 + $0x2c0] sm:$0xff]
    %v336 = vld [vmem:[%s4 + $0x2c8] sm:$0xff]
    %v337 = vld [vmem:[%s4 + $0x2d0] sm:$0xff]
    %v338 = vld [vmem:[%s4 + $0x2d8] sm:$0xff]
    %v339 = vld [vmem:[%s4 + $0x2e0] sm:$0xff]
    %v340 = vld [vmem:[%s4 + $0x2e8] sm:$0xff]
    %v341 = vld [vmem:[%s4 + $0x2f0] sm:$0xff]
    %v342 = vld [vmem:[%s4 + $0x2f8] sm:$0xff]
    %v343 = vld [vmem:[%s4 + $0x300] sm:$0xff]
    %v344 = vld [vmem:[%s4 + $0x308] sm:$0xff]
    %v345 = vld [vmem:[%s4 + $0x310] sm:$0xff]
    %v346 = vld [vmem:[%s4 + $0x318] sm:$0xff]
    %v347 = vld [vmem:[%s4 + $0x320] sm:$0xff]
    %v348 = vld [vmem:[%s4 + $0x328] sm:$0xff]
    %v349 = vld [vmem:[%s4 + $0x330] sm:$0xff]
    %v350 = vld [vmem:[%s4 + $0x338] sm:$0xff]
    %v351 = vld [vmem:[%s4 + $0x340] sm:$0xff]
    %v352 = vld [vmem:[%s4 + $0x348] sm:$0xff]
    %v353 = vld [vmem:[%s4 + $0x350] sm:$0xff]
    %v354 = vld [vmem:[%s4 + $0x358] sm:$0xff]
    %v355 = vld [vmem:[%s4 + $0x360] sm:$0xff]
    %v356 = vld [vmem:[%s4 + $0x368] sm:$0xff]
    %v357 = vld [vmem:[%s4 + $0x370] sm:$0xff]
    %v358 = vld [vmem:[%s4 + $0x378] sm:$0xff]
    %v359 = vld [vmem:[%s4 + $0x380] sm:$0xff]
    %v360 = vld [vmem:[%s4 + $0x388] sm:$0xff]
    %v361 = vld [vmem:[%s4 + $0x390] sm:$0xff]
    %v362 = vld [vmem:[%s4 + $0x398] sm:$0xff]
    %v363 = vld [vmem:[%s4 + $0x3a0] sm:$0xff]
    %v364 = vld [vmem:[%s4 + $0x3a8] sm:$0xff]
    %v365 = vld [vmem:[%s4 + $0x3b0] sm:$0xff]
    %v366 = vld [vmem:[%s4 + $0x3b8] sm:$0xff]
    %v367 = vld [vmem:[%s4 + $0x3c0] sm:$0xff]
    %v368 = vld [vmem:[%s4 + $0x3c8] sm:$0xff]
    %v369 = vld [vmem:[%s4 + $0x3d0] sm:$0xff]
    %v370 = vld [vmem:[%s4 + $0x3d8] sm:$0xff]
    %v371 = vld [vmem:[%s4 + $0x3e0] sm:$0xff]
    %v372 = vld [vmem:[%s4 + $0x3e8] sm:$0xff]
    %v373 = vld [vmem:[%s4 + $0x3f0] sm:$0xff]
    %v374 = vld [vmem:[%s4 + $0x3f8] sm:$0xff]
    %v375 = vld [vmem:[%s4 + $0x400] sm:$0xff]
    %v376 = vld [vmem:[%s4 + $0x408] sm:$0xff]
    %v377 = vld [vmem:[%s4 + $0x410] sm:$0xff]
    %v378 = vld [vmem:[%s4 + $0x418] sm:$0xff]
    %v379 = vld [vmem:[%s4 + $0x420] sm:$0xff]
    %v380 = vld [vmem:[%s4 + $0x428] sm:$0xff]
    %v381 = vld [vmem:[%s4 + $0x430] sm:$0xff]
    %v382 = vld [vmem:[%s4 + $0x438] sm:$0xff]
    %v383 = vld [vmem:[%s4 + $0x440] sm:$0xff]
    %v384 = vld [vmem:[%s4 + $0x448] sm:$0xff]
    %v385 = vld [vmem:[%s4 + $0x450] sm:$0xff]
    %v386 = vld [vmem:[%s4 + $0x458] sm:$0xff]
    %v387 = vld [vmem:[%s4 + $0x460] sm:$0xff]
    %v388 = vld [vmem:[%s4 + $0x468] sm:$0xff]
    %v389 = vld [vmem:[%s4 + $0x470] sm:$0xff]
    %v390 = vld [vmem:[%s4 + $0x478] sm:$0xff]
    %v391 = vlaneseq
    %v392 = vshrl.u32 %v391, 7
    %v393 = vsub.s32 1, %v392
    %v394 = vrot.slane %v27, %v393
    %395 = vmatprep.subr.mxu0 0.0
    %396 = vmatpush1.msra.mxu0 %v247
    %397 = vmatprep.subr.mxu0 0.0
    %398 = vmatpush1.msra.mxu0 %v248
    %399 = vmatprep.subr.mxu0 0.0
    %400 = vmatpush1.msra.mxu0 %v249
    %401 = vmatprep.subr.mxu0 0.0
    %402 = vmatpush1.msra.mxu0 %v250
    %403 = vmatprep.subr.mxu0 0.0
    %404 = vmatpush1.msra.mxu0 %v251
    %405 = vmatprep.subr.mxu0 0.0
    %406 = vmatpush1.msra.mxu0 %v252
    %407 = vmatprep.subr.mxu0 0.0
    %408 = vmatpush1.msra.mxu0 %v253
    %409 = vmatprep.subr.mxu0 0.0
    %410 = vmatpush1.msra.mxu0 %v254
    %411 = vmatprep.subr.mxu0 0.0
    %412 = vmatpush1.msra.mxu0 %v255
    %413 = vmatprep.subr.mxu0 0.0
    %414 = vmatpush1.msra.mxu0 %v256
    %415 = vmatprep.subr.mxu0 0.0
    %416 = vmatpush1.msra.mxu0 %v257
    %417 = vmatprep.subr.mxu0 0.0
    %418 = vmatpush1.msra.mxu0 %v258
    %419 = vmatprep.subr.mxu0 0.0
    %420 = vmatpush1.msra.mxu0 %v259
    %421 = vmatprep.subr.mxu0 0.0
    %422 = vmatpush1.msra.mxu0 %v260
    %423 = vmatprep.subr.mxu0 0.0
    %424 = vmatpush1.msra.mxu0 %v261
    %425 = vmatprep.subr.mxu0 0.0
    %426 = vmatpush1.msra.mxu0 %v262
    %427 = vmatprep.subr.mxu0 0.0
    %428 = vmatpush1.msra.mxu0 %v263
    %429 = vmatprep.subr.mxu0 0.0
    %430 = vmatpush1.msra.mxu0 %v264
    %431 = vmatprep.subr.mxu0 0.0
    %432 = vmatpush1.msra.mxu0 %v265
    %433 = vmatprep.subr.mxu0 0.0
    %434 = vmatpush1.msra.mxu0 %v266
    %435 = vmatprep.subr.mxu0 0.0
    %436 = vmatpush1.msra.mxu0 %v267
    %437 = vmatprep.subr.mxu0 0.0
    %438 = vmatpush1.msra.mxu0 %v268
    %439 = vmatprep.subr.mxu0 0.0
    %440 = vmatpush1.msra.mxu0 %v269
    %441 = vmatprep.subr.mxu0 0.0
    %442 = vmatpush1.msra.mxu0 %v270
    %443 = vmatprep.subr.mxu0 0.0
    %444 = vmatpush1.msra.mxu0 %v271
    %445 = vmatprep.subr.mxu0 0.0
    %446 = vmatpush1.msra.mxu0 %v272
    %447 = vmatprep.subr.mxu0 0.0
    %448 = vmatpush1.msra.mxu0 %v273
    %449 = vmatprep.subr.mxu0 0.0
    %450 = vmatpush1.msra.mxu0 %v274
    %451 = vmatprep.subr.mxu0 0.0
    %452 = vmatpush1.msra.mxu0 %v275
    %453 = vmatprep.subr.mxu0 0.0
    %454 = vmatpush1.msra.mxu0 %v276
    %455 = vmatprep.subr.mxu0 0.0
    %456 = vmatpush1.msra.mxu0 %v277
    %457 = vmatprep.subr.mxu0 0.0
    %458 = vmatpush1.msra.mxu0 %v278
    %459 = vmatprep.mubr.f32.mxu0 %v212
    %460 = vmatmul.mubr.f32.gmra.mrb[0].mxu0 %v200
    %v461 = vpop.f32.mrb[0].mxu0
    %v462 = vadd.f32 %v394, %v461
    %v463 = vpop.f32.mrb[0].mxu0
    %464 = vdwg.mxu0
    %465 = vmatprep.subr.mxu0 0.0
    %466 = vmatpush1.msra.mxu0 %v279
    %467 = vmatprep.subr.mxu0 0.0
    %468 = vmatpush1.msra.mxu0 %v280
    %469 = vmatprep.subr.mxu0 0.0
    %470 = vmatpush1.msra.mxu0 %v281
    %471 = vmatprep.subr.mxu0 0.0
    %472 = vmatpush1.msra.mxu0 %v282
    %473 = vmatprep.subr.mxu0 0.0
    %474 = vmatpush1.msra.mxu0 %v283
    %475 = vmatprep.subr.mxu0 0.0
    %476 = vmatpush1.msra.mxu0 %v284
    %477 = vmatprep.subr.mxu0 0.0
    %478 = vmatpush1.msra.mxu0 %v285
    %479 = vmatprep.subr.mxu0 0.0
    %480 = vmatpush1.msra.mxu0 %v286
    %481 = vmatprep.subr.mxu0 0.0
    %482 = vmatpush1.msra.mxu0 %v287
    %483 = vmatprep.subr.mxu0 0.0
    %484 = vmatpush1.msra.mxu0 %v288
    %485 = vmatprep.subr.mxu0 0.0
    %486 = vmatpush1.msra.mxu0 %v289
    %487 = vmatprep.subr.mxu0 0.0
    %488 = vmatpush1.msra.mxu0 %v290
    %489 = vmatprep.subr.mxu0 0.0
    %490 = vmatpush1.msra.mxu0 %v291
    %491 = vmatprep.subr.mxu0 0.0
    %492 = vmatpush1.msra.mxu0 %v292
    %493 = vmatprep.subr.mxu0 0.0
    %494 = vmatpush1.msra.mxu0 %v293
    %495 = vmatprep.subr.mxu0 0.0
    %496 = vmatpush1.msra.mxu0 %v294
    %497 = vmatprep.subr.mxu0 0.0
    %498 = vmatpush1.msra.mxu0 %v295
    %499 = vmatprep.subr.mxu0 0.0
    %500 = vmatpush1.msra.mxu0 %v296
    %501 = vmatprep.subr.mxu0 0.0
    %502 = vmatpush1.msra.mxu0 %v297
    %503 = vmatprep.subr.mxu0 0.0
    %504 = vmatpush1.msra.mxu0 %v298
    %505 = vmatprep.subr.mxu0 0.0
    %506 = vmatpush1.msra.mxu0 %v299
    %507 = vmatprep.subr.mxu0 0.0
    %508 = vmatpush1.msra.mxu0 %v300
    %509 = vmatprep.subr.mxu0 0.0
    %510 = vmatpush1.msra.mxu0 %v301
    %511 = vmatprep.subr.mxu0 0.0
    %512 = vmatpush1.msra.mxu0 %v302
    %513 = vmatprep.subr.mxu0 0.0
    %514 = vmatpush1.msra.mxu0 %v303
    %515 = vmatprep.subr.mxu0 0.0
    %516 = vmatpush1.msra.mxu0 %v304
    %517 = vmatprep.subr.mxu0 0.0
    %518 = vmatpush1.msra.mxu0 %v305
    %519 = vmatprep.subr.mxu0 0.0
    %520 = vmatpush1.msra.mxu0 %v306
    %521 = vmatprep.subr.mxu0 0.0
    %522 = vmatpush1.msra.mxu0 %v307
    %523 = vmatprep.subr.mxu0 0.0
    %524 = vmatpush1.msra.mxu0 %v308
    %525 = vmatprep.subr.mxu0 0.0
    %526 = vmatpush1.msra.mxu0 %v309
    %527 = vmatprep.subr.mxu0 0.0
    %528 = vmatpush1.msra.mxu0 %v310
    %529 = vmatprep.mubr.f32.mxu0 %v219
    %530 = vmatmul.mubr.f32.gmra.mrb[0].mxu0 %v220
    %v531 = vpop.f32.mrb[0].mxu0
    %v532 = vadd.f32 %v462, %v531
    %v533 = vpop.f32.mrb[0].mxu0
    %534 = vdwg.mxu0
    %535 = vmatprep.subr.mxu0 0.0
    %536 = vmatpush1.msra.mxu0 %v311
    %537 = vmatprep.subr.mxu0 0.0
    %538 = vmatpush1.msra.mxu0 %v312
    %539 = vmatprep.subr.mxu0 0.0
    %540 = vmatpush1.msra.mxu0 %v313
    %541 = vmatprep.subr.mxu0 0.0
    %542 = vmatpush1.msra.mxu0 %v314
    %543 = vmatprep.subr.mxu0 0.0
    %544 = vmatpush1.msra.mxu0 %v315
    %545 = vmatprep.subr.mxu0 0.0
    %546 = vmatpush1.msra.mxu0 %v316
    %547 = vmatprep.subr.mxu0 0.0
    %548 = vmatpush1.msra.mxu0 %v317
    %549 = vmatprep.subr.mxu0 0.0
    %550 = vmatpush1.msra.mxu0 %v318
    %551 = vmatprep.subr.mxu0 0.0
    %552 = vmatpush1.msra.mxu0 %v319
    %553 = vmatprep.subr.mxu0 0.0
    %554 = vmatpush1.msra.mxu0 %v320
    %555 = vmatprep.subr.mxu0 0.0
    %556 = vmatpush1.msra.mxu0 %v321
    %557 = vmatprep.subr.mxu0 0.0
    %558 = vmatpush1.msra.mxu0 %v322
    %559 = vmatprep.subr.mxu0 0.0
    %560 = vmatpush1.msra.mxu0 %v323
    %561 = vmatprep.subr.mxu0 0.0
    %562 = vmatpush1.msra.mxu0 %v324
    %563 = vmatprep.subr.mxu0 0.0
    %564 = vmatpush1.msra.mxu0 %v325
    %565 = vmatprep.subr.mxu0 0.0
    %566 = vmatpush1.msra.mxu0 %v326
    %567 = vmatprep.subr.mxu0 0.0
    %568 = vmatpush1.msra.mxu0 %v327
    %569 = vmatprep.subr.mxu0 0.0
    %570 = vmatpush1.msra.mxu0 %v328
    %571 = vmatprep.subr.mxu0 0.0
    %572 = vmatpush1.msra.mxu0 %v329
    %573 = vmatprep.subr.mxu0 0.0
    %574 = vmatpush1.msra.mxu0 %v330
    %575 = vmatprep.subr.mxu0 0.0
    %576 = vmatpush1.msra.mxu0 %v331
    %577 = vmatprep.subr.mxu0 0.0
    %578 = vmatpush1.msra.mxu0 %v332
    %579 = vmatprep.subr.mxu0 0.0
    %580 = vmatpush1.msra.mxu0 %v333
    %581 = vmatprep.subr.mxu0 0.0
    %582 = vmatpush1.msra.mxu0 %v334
    %583 = vmatprep.subr.mxu0 0.0
    %584 = vmatpush1.msra.mxu0 %v335
    %585 = vmatprep.subr.mxu0 0.0
    %586 = vmatpush1.msra.mxu0 %v336
    %587 = vmatprep.subr.mxu0 0.0
    %588 = vmatpush1.msra.mxu0 %v337
    %589 = vmatprep.subr.mxu0 0.0
    %590 = vmatpush1.msra.mxu0 %v338
    %591 = vmatprep.subr.mxu0 0.0
    %592 = vmatpush1.msra.mxu0 %v339
    %593 = vmatprep.subr.mxu0 0.0
    %594 = vmatpush1.msra.mxu0 %v340
    %595 = vmatprep.subr.mxu0 0.0
    %596 = vmatpush1.msra.mxu0 %v341
    %597 = vmatprep.subr.mxu0 0.0
    %598 = vmatpush1.msra.mxu0 %v342
    %599 = vmatprep.mubr.f32.mxu0 %v229
    %600 = vmatmul.mubr.f32.gmra.mrb[0].mxu0 %v221
    %v601 = vpop.f32.mrb[0].mxu0
    %v602 = vadd.f32 %v532, %v601
    %v603 = vpop.f32.mrb[0].mxu0
    %604 = vdwg.mxu0
    %605 = vmatprep.subr.mxu0 0.0
    %606 = vmatpush1.msra.mxu0 %v343
    %607 = vmatprep.subr.mxu0 0.0
    %608 = vmatpush1.msra.mxu0 %v344
    %609 = vmatprep.subr.mxu0 0.0
    %610 = vmatpush1.msra.mxu0 %v345
    %611 = vmatprep.subr.mxu0 0.0
    %612 = vmatpush1.msra.mxu0 %v346
    %613 = vmatprep.subr.mxu0 0.0
    %614 = vmatpush1.msra.mxu0 %v347
    %615 = vmatprep.subr.mxu0 0.0
    %616 = vmatpush1.msra.mxu0 %v348
    %617 = vmatprep.subr.mxu0 0.0
    %618 = vmatpush1.msra.mxu0 %v349
    %619 = vmatprep.subr.mxu0 0.0
    %620 = vmatpush1.msra.mxu0 %v350
    %621 = vmatprep.subr.mxu0 0.0
    %622 = vmatpush1.msra.mxu0 %v351
    %623 = vmatprep.subr.mxu0 0.0
    %624 = vmatpush1.msra.mxu0 %v352
    %625 = vmatprep.subr.mxu0 0.0
    %626 = vmatpush1.msra.mxu0 %v353
    %627 = vmatprep.subr.mxu0 0.0
    %628 = vmatpush1.msra.mxu0 %v354
    %629 = vmatprep.subr.mxu0 0.0
    %630 = vmatpush1.msra.mxu0 %v355
    %631 = vmatprep.subr.mxu0 0.0
    %632 = vmatpush1.msra.mxu0 %v356
    %633 = vmatprep.subr.mxu0 0.0
    %634 = vmatpush1.msra.mxu0 %v357
    %635 = vmatprep.subr.mxu0 0.0
    %636 = vmatpush1.msra.mxu0 %v358
    %637 = vmatprep.subr.mxu0 0.0
    %638 = vmatpush1.msra.mxu0 %v359
    %639 = vmatprep.subr.mxu0 0.0
    %640 = vmatpush1.msra.mxu0 %v360
    %641 = vmatprep.subr.mxu0 0.0
    %642 = vmatpush1.msra.mxu0 %v361
    %643 = vmatprep.subr.mxu0 0.0
    %644 = vmatpush1.msra.mxu0 %v362
    %645 = vmatprep.subr.mxu0 0.0
    %646 = vmatpush1.msra.mxu0 %v363
    %647 = vmatprep.subr.mxu0 0.0
    %648 = vmatpush1.msra.mxu0 %v364
    %649 = vmatprep.subr.mxu0 0.0
    %650 = vmatpush1.msra.mxu0 %v365
    %651 = vmatprep.subr.mxu0 0.0
    %652 = vmatpush1.msra.mxu0 %v366
    %653 = vmatprep.subr.mxu0 0.0
    %654 = vmatpush1.msra.mxu0 %v367
    %655 = vmatprep.subr.mxu0 0.0
    %656 = vmatpush1.msra.mxu0 %v368
    %657 = vmatprep.subr.mxu0 0.0
    %658 = vmatpush1.msra.mxu0 %v369
    %659 = vmatprep.subr.mxu0 0.0
    %660 = vmatpush1.msra.mxu0 %v370
    %661 = vmatprep.subr.mxu0 0.0
    %662 = vmatpush1.msra.mxu0 %v371
    %663 = vmatprep.subr.mxu0 0.0
    %664 = vmatpush1.msra.mxu0 %v372
    %665 = vmatprep.subr.mxu0 0.0
    %666 = vmatpush1.msra.mxu0 %v373
    %667 = vmatprep.subr.mxu0 0.0
    %668 = vmatpush1.msra.mxu0 %v374
    %669 = vmatprep.mubr.f32.mxu0 %v236
    %670 = vmatmul.mubr.f32.gmra.mrb[0].mxu0 %v237
    %v671 = vpop.f32.mrb[0].mxu0
    %v672 = vadd.f32 %v602, %v671
    %v673 = vpop.f32.mrb[0].mxu0
    %674 = vdwg.mxu0
    %675 = vmatprep.subr.mxu0 0.0
    %676 = vmatpush1.msra.mxu0 %v375
    %677 = vmatprep.subr.mxu0 0.0
    %678 = vmatpush1.msra.mxu0 %v376
    %679 = vmatprep.subr.mxu0 0.0
    %680 = vmatpush1.msra.mxu0 %v377
    %681 = vmatprep.subr.mxu0 0.0
    %682 = vmatpush1.msra.mxu0 %v378
    %683 = vmatprep.subr.mxu0 0.0
    %684 = vmatpush1.msra.mxu0 %v379
    %685 = vmatprep.subr.mxu0 0.0
    %686 = vmatpush1.msra.mxu0 %v380
    %687 = vmatprep.subr.mxu0 0.0
    %688 = vmatpush1.msra.mxu0 %v381
    %689 = vmatprep.subr.mxu0 0.0
    %690 = vmatpush1.msra.mxu0 %v382
    %691 = vmatprep.subr.mxu0 0.0
    %692 = vmatpush1.msra.mxu0 %v383
    %693 = vmatprep.subr.mxu0 0.0
    %694 = vmatpush1.msra.mxu0 %v384
    %695 = vmatprep.subr.mxu0 0.0
    %696 = vmatpush1.msra.mxu0 %v385
    %697 = vmatprep.subr.mxu0 0.0
    %698 = vmatpush1.msra.mxu0 %v386
    %699 = vmatprep.subr.mxu0 0.0
    %700 = vmatpush1.msra.mxu0 %v387
    %701 = vmatprep.subr.mxu0 0.0
    %702 = vmatpush1.msra.mxu0 %v388
    %703 = vmatprep.subr.mxu0 0.0
    %704 = vmatpush1.msra.mxu0 %v389
    %705 = vmatprep.subr.mxu0 0.0
    %706 = vmatpush1.msra.mxu0 %v390
    %707 = vmatprep.subr.mxu0 0.0
    %708 = vmatpush1.msra.mxu0 0.0
    %709 = vmatprep.subr.mxu0 0.0
    %710 = vmatpush1.msra.mxu0 0.0
    %711 = vmatprep.subr.mxu0 0.0
    %712 = vmatpush1.msra.mxu0 0.0
    %713 = vmatprep.subr.mxu0 0.0
    %714 = vmatpush1.msra.mxu0 0.0
    %715 = vmatprep.subr.mxu0 0.0
    %716 = vmatpush1.msra.mxu0 0.0
    %717 = vmatprep.subr.mxu0 0.0
    %718 = vmatpush1.msra.mxu0 0.0
    %719 = vmatprep.subr.mxu0 0.0
    %720 = vmatpush1.msra.mxu0 0.0
    %721 = vmatprep.subr.mxu0 0.0
    %722 = vmatpush1.msra.mxu0 0.0
    %723 = vmatprep.subr.mxu0 0.0
    %724 = vmatpush1.msra.mxu0 0.0
    %725 = vmatprep.subr.mxu0 0.0
    %726 = vmatpush1.msra.mxu0 0.0
    %727 = vmatprep.subr.mxu0 0.0
    %728 = vmatpush1.msra.mxu0 0.0
    %729 = vmatprep.subr.mxu0 0.0
    %730 = vmatpush1.msra.mxu0 0.0
    %731 = vmatprep.subr.mxu0 0.0
    %732 = vmatpush1.msra.mxu0 0.0
    %733 = vmatprep.subr.mxu0 0.0
    %734 = vmatpush1.msra.mxu0 0.0
    %735 = vmatprep.subr.mxu0 0.0
    %736 = vmatpush1.msra.mxu0 0.0
    %737 = vmatprep.subr.mxu0 0.0
    %738 = vmatpush1.msra.mxu0 0.0
    %739 = vmatprep.mubr.f32.mxu0 0.0
    %740 = vmatmul.mubr.f32.gmra.mrb[0].mxu0 %v238
    %v741 = vpop.f32.mrb[0].mxu0
    %v742 = vadd.f32 %v672, %v741
    %v743 = vpop.f32.mrb[0].mxu0
    %744 = vdwg.mxu0
    %vm745 = vcmp.gt.f32.partialorder %v742, 0.0
    %v746 = vmul.f32 %v742, 0.01
    %v747 = vsel %vm745, %v742, %v746
    %v748 = vld [vmem:[%s5] sm:$0xff]
    %v749 = vld [vmem:[%s5 + $0x8] sm:$0xff]
    %v750 = vld [vmem:[%s5 + $0x10] sm:$0xff]
    %v751 = vld [vmem:[%s5 + $0x18] sm:$0xff]
    %v752 = vld [vmem:[%s5 + $0x20] sm:$0xff]
    %v753 = vld [vmem:[%s5 + $0x28] sm:$0xff]
    %v754 = vld [vmem:[%s5 + $0x30] sm:$0xff]
    %v755 = vld [vmem:[%s5 + $0x38] sm:$0xff]
    %v756 = vld [vmem:[%s5 + $0x40] sm:$0xff]
    %v757 = vld [vmem:[%s5 + $0x48] sm:$0xff]
    %v758 = vld [vmem:[%s5 + $0x50] sm:$0xff]
    %v759 = vld [vmem:[%s5 + $0x58] sm:$0xff]
    %v760 = vlaneseq
    %v761 = vshrl.u32 %v760, 7
    %v762 = vsub.s32 2, %v761
    %v763 = vrot.slane %v27, %v762
    %v765 = vsel %vm76, %v747, 0
    %767 = vmatprep.subr.mxu0 0.0
    %768 = vmatpush1.msra.mxu0 %v748
    %769 = vmatprep.subr.mxu0 0.0
    %770 = vmatpush1.msra.mxu0 %v749
    %771 = vmatprep.subr.mxu0 0.0
    %772 = vmatpush1.msra.mxu0 %v750
    %773 = vmatprep.subr.mxu0 0.0
    %774 = vmatpush1.msra.mxu0 %v751
    %775 = vmatprep.subr.mxu0 0.0
    %776 = vmatpush1.msra.mxu0 %v752
    %777 = vmatprep.subr.mxu0 0.0
    %778 = vmatpush1.msra.mxu0 %v753
    %779 = vmatprep.subr.mxu0 0.0
    %780 = vmatpush1.msra.mxu0 %v754
    %781 = vmatprep.subr.mxu0 0.0
    %782 = vmatpush1.msra.mxu0 %v755
    %783 = vmatprep.subr.mxu0 0.0
    %784 = vmatpush1.msra.mxu0 0.0
    %785 = vmatprep.subr.mxu0 0.0
    %786 = vmatpush1.msra.mxu0 0.0
    %787 = vmatprep.subr.mxu0 0.0
    %788 = vmatpush1.msra.mxu0 0.0
    %789 = vmatprep.subr.mxu0 0.0
    %790 = vmatpush1.msra.mxu0 0.0
    %791 = vmatprep.subr.mxu0 0.0
    %792 = vmatpush1.msra.mxu0 0.0
    %793 = vmatprep.subr.mxu0 0.0
    %794 = vmatpush1.msra.mxu0 0.0
    %795 = vmatprep.subr.mxu0 0.0
    %796 = vmatpush1.msra.mxu0 0.0
    %797 = vmatprep.subr.mxu0 0.0
    %798 = vmatpush1.msra.mxu0 0.0
    %799 = vmatprep.subr.mxu0 0.0
    %800 = vmatpush1.msra.mxu0 0.0
    %801 = vmatprep.subr.mxu0 0.0
    %802 = vmatpush1.msra.mxu0 0.0
    %803 = vmatprep.subr.mxu0 0.0
    %804 = vmatpush1.msra.mxu0 0.0
    %805 = vmatprep.subr.mxu0 0.0
    %806 = vmatpush1.msra.mxu0 0.0
    %807 = vmatprep.subr.mxu0 0.0
    %808 = vmatpush1.msra.mxu0 0.0
    %809 = vmatprep.subr.mxu0 0.0
    %810 = vmatpush1.msra.mxu0 0.0
    %811 = vmatprep.subr.mxu0 0.0
    %812 = vmatpush1.msra.mxu0 0.0
    %813 = vmatprep.subr.mxu0 0.0
    %814 = vmatpush1.msra.mxu0 0.0
    %815 = vmatprep.subr.mxu0 0.0
    %816 = vmatpush1.msra.mxu0 0.0
    %817 = vmatprep.subr.mxu0 0.0
    %818 = vmatpush1.msra.mxu0 0.0
    %819 = vmatprep.subr.mxu0 0.0
    %820 = vmatpush1.msra.mxu0 0.0
    %821 = vmatprep.subr.mxu0 0.0
    %822 = vmatpush1.msra.mxu0 0.0
    %823 = vmatprep.subr.mxu0 0.0
    %824 = vmatpush1.msra.mxu0 0.0
    %825 = vmatprep.subr.mxu0 0.0
    %826 = vmatpush1.msra.mxu0 0.0
    %827 = vmatprep.subr.mxu0 0.0
    %828 = vmatpush1.msra.mxu0 0.0
    %829 = vmatprep.subr.mxu0 0.0
    %830 = vmatpush1.msra.mxu0 0.0
    %831 = vmatprep.mubr.f32.mxu0 0.0
    %832 = vmatmul.mubr.f32.gmra.mrb[0].mxu0 %v765
    %v833 = vpop.f32.mrb[0].mxu0
    %v834 = vadd.f32 %v763, %v833
    %v835 = vpop.f32.mrb[0].mxu0
    %836 = vdwg.mxu0
    %vm837 = vcmask 9216
    %v838 = vsel %vm837, %v834, -inf
    %839 = vmax.xlane.f32.xlu0 %v838
    %v840 = vpop.xlane.xlu0 %839
    %v841 = vsub.f32 %v834, %v840
    %v842 = vmul.f32 %v841, 1.442695
    %v843 = vpow.pop %v842
    %v844 = vsel %vm837, %v843, 0.0
    %845 = vadd.xlane.f32.xlu0 %v844
    %v846 = vpop.xlane.xlu0 %845
    %v847 = vrcp.pop %v846
    %v848 = vmul.f32 %v843, %v847
    %850 = vrot.lane.b32.xlu0 %v834, 96
    %v851 = vpop.permute.xlu0 %850
    %v852 = vsel %vm73, %v851, 0
    %854 = vmatprep.subr.mxu0 0.0
    %855 = vmatpush1.msra.mxu0 %v756
    %856 = vmatprep.subr.mxu0 0.0
    %857 = vmatpush1.msra.mxu0 %v757
    %858 = vmatprep.subr.mxu0 0.0
    %859 = vmatpush1.msra.mxu0 %v758
    %860 = vmatprep.subr.mxu0 0.0
    %861 = vmatpush1.msra.mxu0 %v759
    %862 = vmatprep.subr.mxu0 0.0
    %863 = vmatpush1.msra.mxu0 0.0
    %864 = vmatprep.subr.mxu0 0.0
    %865 = vmatpush1.msra.mxu0 0.0
    %866 = vmatprep.subr.mxu0 0.0
    %867 = vmatpush1.msra.mxu0 0.0
    %868 = vmatprep.subr.mxu0 0.0
    %869 = vmatpush1.msra.mxu0 0.0
    %870 = vmatprep.subr.mxu0 0.0
    %871 = vmatpush1.msra.mxu0 0.0
    %872 = vmatprep.subr.mxu0 0.0
    %873 = vmatpush1.msra.mxu0 0.0
    %874 = vmatprep.subr.mxu0 0.0
    %875 = vmatpush1.msra.mxu0 0.0
    %876 = vmatprep.subr.mxu0 0.0
    %877 = vmatpush1.msra.mxu0 0.0
    %878 = vmatprep.subr.mxu0 0.0
    %879 = vmatpush1.msra.mxu0 0.0
    %880 = vmatprep.subr.mxu0 0.0
    %881 = vmatpush1.msra.mxu0 0.0
    %882 = vmatprep.subr.mxu0 0.0
    %883 = vmatpush1.msra.mxu0 0.0
    %884 = vmatprep.subr.mxu0 0.0
    %885 = vmatpush1.msra.mxu0 0.0
    %886 = vmatprep.subr.mxu0 0.0
    %887 = vmatpush1.msra.mxu0 0.0
    %888 = vmatprep.subr.mxu0 0.0
    %889 = vmatpush1.msra.mxu0 0.0
    %890 = vmatprep.subr.mxu0 0.0
    %891 = vmatpush1.msra.mxu0 0.0
    %892 = vmatprep.subr.mxu0 0.0
    %893 = vmatpush1.msra.mxu0 0.0
    %894 = vmatprep.subr.mxu0 0.0
    %895 = vmatpush1.msra.mxu0 0.0
    %896 = vmatprep.subr.mxu0 0.0
    %897 = vmatpush1.msra.mxu0 0.0
    %898 = vmatprep.subr.mxu0 0.0
    %899 = vmatpush1.msra.mxu0 0.0
    %900 = vmatprep.subr.mxu0 0.0
    %901 = vmatpush1.msra.mxu0 0.0
    %902 = vmatprep.subr.mxu0 0.0
    %903 = vmatpush1.msra.mxu0 0.0
    %904 = vmatprep.subr.mxu0 0.0
    %905 = vmatpush1.msra.mxu0 0.0
    %906 = vmatprep.subr.mxu0 0.0
    %907 = vmatpush1.msra.mxu0 0.0
    %908 = vmatprep.subr.mxu0 0.0
    %909 = vmatpush1.msra.mxu0 0.0
    %910 = vmatprep.subr.mxu0 0.0
    %911 = vmatpush1.msra.mxu0 0.0
    %912 = vmatprep.subr.mxu0 0.0
    %913 = vmatpush1.msra.mxu0 0.0
    %914 = vmatprep.subr.mxu0 0.0
    %915 = vmatpush1.msra.mxu0 0.0
    %916 = vmatprep.subr.mxu0 0.0
    %917 = vmatpush1.msra.mxu0 0.0
    %918 = vmatprep.mubr.f32.mxu0 0.0
    %919 = vmatmul.mubr.f32.gmra.mrb[0].mxu0 %v852
    %v920 = vpop.f32.mrb[0].mxu0
    %v921 = vadd.f32 0.0, %v920
    %v922 = vpop.f32.mrb[0].mxu0
    %923 = vdwg.mxu0
    %v924 = vlaneseq
    %v925 = vshrl.u32 %v924, 7
    %v926 = vsub.s32 3, %v925
    %v927 = vrot.slane %v27, %v926
    %v928 = vadd.f32 %v921, %v927
    %vm929 = vcmask 33792
    %v930 = vsel %vm929, %v928, -inf
    %931 = vmax.xlane.f32.xlu0 %v930
    %v932 = vpop.xlane.xlu0 %931
    %v933 = vsub.f32 %v928, %v932
    %v934 = vmul.f32 %v933, 1.442695
    %v935 = vpow.pop %v934
    %v936 = vsel %vm929, %v935, 0.0
    %937 = vadd.xlane.f32.xlu0 %v936
    %v938 = vpop.xlane.xlu0 %937
    %v939 = vrcp.pop %v938
    %v940 = vmul.f32 %v935, %v939
    %942 = vrot.lane.b32.xlu0 %v940, 2
    %v943 = vpop.permute.xlu0 %942
    %vm945 = vcmask 15360
    %v946 = vsel %vm945, %v848, %v943
    %vm947 = vcmask 56320
    %v948 = vsel %vm947, %v946, 0.0
    %949 = vst [vmem:[#allocation2] sm:$0x3] %v948
    // Predicated region
    $region30: #{tpu_custom_call.1} parent=1 // pred_check
      _
    $region31: #{tpu_custom_call.1} parent=1 // pred_check_branch
      %951 = sbr.rel (0) target = $region33
    $region32: #{tpu_custom_call.1} parent=1 // pred_region
      %s953 = ssub.s32 32, 32
      %954 = vsyncadd [#allocation3], %s953
      %s956 = sshll.u32 [#allocation2], 4
      %s957 = int_to_ptr.vmem [resolvable:$true] %s956
      %959 = dma.vmem_to_hbm [thread:$0]  %s957, 32, %s7, [#allocation3]
    $region33: #{tpu_custom_call.1} parent=1 // pred_fallthru
      _
    // Predicated region
    $region34: #{tpu_custom_call.1} parent=1 // pred_check
      _
    $region35: #{tpu_custom_call.1} parent=1 // pred_check_branch
      %961 = sbr.rel (0) target = $region37
    $region36: #{tpu_custom_call.1} parent=1 // pred_region
      %962 = dma.done [#allocation3], 32
    $region37: #{tpu_custom_call.1} parent=1 // pred_fallthru
      _
    %963 = vsyncpa [#allocation3], 1

</llo_original>
